<compile_context>
chip_gen: v5e
topology: v5e:2x2
jax: 0.10.0
libtpu: 0.0.40
codegen_flags: <defaults>
</compile_context>

<pallas_src>
import functools

import jax
import jax.numpy as jnp
from jax.experimental import pallas as pl
from jax.experimental.pallas import tpu as pltpu

_LANE = 128      # vreg lane width
_SUBLANE = 8     # f32 sublane count


def _round_up(n, m):
    return ((n + m - 1) // m) * m


def _cdiv(a, b):
    return (a + b - 1) // b


def _mlp_tagger_kernel(x_ref, w1_ref, b1_ref, w2_ref, b2_ref, o_ref):
    # x_ref : (bb, D)  native input dtype; .float() cast fused here
    # w1_ref: (D, Hp)  f32, VMEM-resident across the batch grid
    # b1_ref: (1, Hp)  f32
    # w2_ref: (Hp, C)  f32, VMEM-resident (C kept narrow -> narrow writeback)
    # b2_ref: (1, C)   f32
    # o_ref : (bb, C)  f32
    x = x_ref[...].astype(jnp.float32)                         # fused x.float()
    h = jnp.dot(x, w1_ref[...], preferred_element_type=jnp.float32) + b1_ref[...]
    h = jnp.tanh(h)                                            # f32 EUP tanh
    y = jnp.dot(h, w2_ref[...], preferred_element_type=jnp.float32) + b2_ref[...]
    o_ref[...] = y.astype(o_ref.dtype)


def prepare_params(w1, b1, w2, b2):
    """One-time parameter packing (do NOT call per forward).

    w1: [D, H], b1: [H], w2: [H, C], b2: [C]  (already transposed vs. PyTorch).
    Pads only the hidden dim to a lane multiple (inert padding); keeps D and C
    un-padded so the streamed input and the output writeback carry no dead bytes.
    """
    D, H = w1.shape
    C = w2.shape[1]
    Hp = _round_up(H, _LANE)
    w1p = jnp.zeros((D, Hp), jnp.float32).at[:, :H].set(w1.astype(jnp.float32))
    b1p = jnp.zeros((1, Hp), jnp.float32).at[0, :H].set(
        b1.reshape(-1).astype(jnp.float32))
    w2p = jnp.zeros((Hp, C), jnp.float32).at[:H, :].set(w2.astype(jnp.float32))
    b2p = b2.reshape(1, C).astype(jnp.float32)
    return w1p, b1p, w2p, b2p


@functools.partial(jax.jit, static_argnames=("block_b",))
def tagger_forward(x, w1p, b1p, w2p, b2p, *, block_b=2048):
    """x: [B, D] (any float dtype); padded params from prepare_params.
    Returns logits [B, C] float32 (exact PyTorch f32 semantics)."""
    B, D = x.shape
    Hp = w1p.shape[1]
    C = w2p.shape[1]

    # Balanced batch tiles: minimal row padding, and >=2 grid steps whenever
    # B > 8 so the 'parallel' batch axis shards across both v7x TensorCores.
    n_steps = _cdiv(B, block_b)
    if B > _SUBLANE:
        n_steps = max(n_steps, 2)
    bb = _round_up(_cdiv(B, n_steps), _SUBLANE)
    Bp = _round_up(B, bb)
    xp = x if Bp == B else jnp.pad(x, ((0, Bp - B), (0, 0)))
    grid = (Bp // bb,)

    # VMEM budget: double-buffered x/out tiles + (tiny) resident weights,
    # clamped to 3/4 of the chip's physical VMEM (48 MiB on v7x, 96 on v5e/v6e).
    x_tile_bytes = bb * D * xp.dtype.itemsize
    out_tile_bytes = bb * C * 4
    weight_bytes = (D * Hp + Hp * C + Hp + C) * 4
    vmem_limit = 2 * (x_tile_bytes + out_tile_bytes) + 2 * weight_bytes + (4 << 20)
    try:
        vmem_cap = pltpu.get_tpu_info().vmem_capacity_bytes
    except Exception:
        vmem_cap = 64 << 20
    vmem_limit = int(max(16 << 20, min(vmem_limit, (vmem_cap * 3) // 4)))

    cost = pl.CostEstimate(
        flops=2 * Bp * (D * Hp + Hp * C),
        transcendentals=Bp * Hp,
        bytes_accessed=Bp * D * xp.dtype.itemsize + weight_bytes + Bp * C * 4,
    )

    out = pl.pallas_call(
        _mlp_tagger_kernel,
        out_shape=jax.ShapeDtypeStruct((Bp, C), jnp.float32),
        grid_spec=pltpu.PrefetchScalarGridSpec(
            num_scalar_prefetch=0,
            grid=grid,
            in_specs=[
                pl.BlockSpec((bb, D), lambda i: (i, 0)),    # x tile (streams)
                pl.BlockSpec((D, Hp), lambda i: (0, 0)),    # W1 (resident)
                pl.BlockSpec((1, Hp), lambda i: (0, 0)),    # b1 (resident)
                pl.BlockSpec((Hp, C), lambda i: (0, 0)),    # W2 (resident)
                pl.BlockSpec((1, C), lambda i: (0, 0)),     # b2 (resident)
            ],
            out_specs=pl.BlockSpec((bb, C), lambda i: (i, 0)),   # narrow output
        ),
        compiler_params=pltpu.CompilerParams(
            dimension_semantics=("parallel",),   # batch axis shards across TCs
            vmem_limit_bytes=vmem_limit,
        ),
        cost_estimate=cost,
    )(xp, w1p, b1p, w2p, b2p)

    return out if Bp == B else out[:B]


def init_params(key, input_size, hidden_dim, num_of_classes):
    """Deterministic init mirroring nn.Linear's U(-1/sqrt(fan_in), +1/sqrt(fan_in))."""
    k1, k2, k3, k4 = jax.random.split(key, 4)
    lim1 = 1.0 / jnp.sqrt(input_size)
    lim2 = 1.0 / jnp.sqrt(hidden_dim)
    # stored already transposed: [in, out]
    w1 = jax.random.uniform(k1, (input_size, hidden_dim), jnp.float32, -lim1, lim1)
    b1 = jax.random.uniform(k2, (hidden_dim,), jnp.float32, -lim1, lim1)
    w2 = jax.random.uniform(k3, (hidden_dim, num_of_classes), jnp.float32, -lim2, lim2)
    b2 = jax.random.uniform(k4, (num_of_classes,), jnp.float32, -lim2, lim2)
    return w1, b1, w2, b2


if __name__ == "__main__":
    # Window-based tagger over pre-trained embeddings:
    # batch=8 windows, input_size=64 (concatenated window embeddings),
    # hidden_dim=32, num_of_classes=16.
    batch, input_size, hidden_dim, num_of_classes = 8, 64, 32, 16

    key = jax.random.PRNGKey(0)
    kx, kp, kx2 = jax.random.split(key, 3)
    x = jax.random.normal(kx, (batch, input_size), dtype=jnp.float32)
    w1, b1, w2, b2 = init_params(kp, input_size, hidden_dim, num_of_classes)
    params = prepare_params(w1, b1, w2, b2)   # one-time padding, outside forward

    ref_fn = lambda xx: jnp.tanh(xx.astype(jnp.float32) @ w1 + b1) @ w2 + b2

    # 1) f32 path, tiny batch (single grid step, no padding, exact semantics).
    out = tagger_forward(x, *params)
    jax.block_until_ready(out)
    assert out.shape == (batch, num_of_classes)
    assert out.dtype == jnp.float32
    assert jnp.allclose(out, ref_fn(x), atol=1e-5, rtol=1e-5)

    # 2) bf16 embeddings streamed from HBM (halved input bytes), non-tile-multiple
    #    batch -> exercises fused cast, balanced 2-step parallel grid, small row pad.
    x2 = jax.random.normal(kx2, (200, input_size), dtype=jnp.bfloat16)
    out2 = tagger_forward(x2, *params)
    jax.block_until_ready(out2)
    assert out2.shape == (200, num_of_classes)
    assert jnp.allclose(out2, ref_fn(x2), atol=1e-4, rtol=1e-4)

    print("KERNEL_OK")
</pallas_src>

<mosaic_0001>
module attributes {stable_mosaic.version = 11 : i64} {
  func.func @_mlp_tagger_kernel(%arg0: i32, %arg1: memref<8x64xf32, #tpu.memory_space<vmem>>, %arg2: memref<64x128xf32, #tpu.memory_space<vmem>>, %arg3: memref<1x128xf32, #tpu.memory_space<vmem>>, %arg4: memref<128x16xf32, #tpu.memory_space<vmem>>, %arg5: memref<1x16xf32, #tpu.memory_space<vmem>>, %arg6: memref<8x16xf32, #tpu.memory_space<vmem>>) attributes {dimension_semantics = [#tpu.dimension_semantics<parallel>], iteration_bounds = array<i64: 1>, scalar_prefetch = 0 : i64, scratch_operands = 0 : i64, tpu.core_type = #tpu.core_type<tc>, window_params = [{transform_indices = @transform_0, window_bounds = array<i64: 8, 64>}, {pipeline_mode = #tpu.pipeline_mode<synchronous>, transform_indices = @transform_1, window_bounds = array<i64: 64, 128>}, {pipeline_mode = #tpu.pipeline_mode<synchronous>, transform_indices = @transform_2, window_bounds = array<i64: 1, 128>}, {pipeline_mode = #tpu.pipeline_mode<synchronous>, transform_indices = @transform_3, window_bounds = array<i64: 128, 16>}, {pipeline_mode = #tpu.pipeline_mode<synchronous>, transform_indices = @transform_4, window_bounds = array<i64: 1, 16>}, {transform_indices = @transform_5, window_bounds = array<i64: 8, 16>}]} {
    %c0 = arith.constant 0 : index
    %c0_0 = arith.constant 0 : index
    %0 = vector.load %arg1[%c0, %c0_0] : memref<8x64xf32, #tpu.memory_space<vmem>>, vector<8x64xf32>
    %c0_1 = arith.constant 0 : index
    %c0_2 = arith.constant 0 : index
    %1 = vector.load %arg2[%c0_1, %c0_2] : memref<64x128xf32, #tpu.memory_space<vmem>>, vector<64x128xf32>
    %cst = arith.constant dense<0.000000e+00> : vector<8x128xf32>
    %2 = tpu.matmul %0, %1, %cst {dimension_numbers = #tpu.dot_dimension_numbers<[1], [0], [0], [1], [0, 0, 1, 1], [], []>} : vector<8x64xf32>, vector<64x128xf32>, vector<8x128xf32> -> vector<8x128xf32>
    %c0_3 = arith.constant 0 : index
    %c0_4 = arith.constant 0 : index
    %3 = vector.load %arg3[%c0_3, %c0_4] : memref<1x128xf32, #tpu.memory_space<vmem>>, vector<1x128xf32>
    %4 = vector.broadcast %3 : vector<1x128xf32> to vector<8x128xf32>
    %5 = arith.addf %2, %4 : vector<8x128xf32>
    %6 = math.tanh %5 : vector<8x128xf32>
    %c0_5 = arith.constant 0 : index
    %c0_6 = arith.constant 0 : index
    %7 = vector.load %arg4[%c0_5, %c0_6] : memref<128x16xf32, #tpu.memory_space<vmem>>, vector<128x16xf32>
    %cst_7 = arith.constant dense<0.000000e+00> : vector<8x16xf32>
    %8 = tpu.matmul %6, %7, %cst_7 {dimension_numbers = #tpu.dot_dimension_numbers<[1], [0], [0], [1], [0, 0, 1, 1], [], []>} : vector<8x128xf32>, vector<128x16xf32>, vector<8x16xf32> -> vector<8x16xf32>
    %c0_8 = arith.constant 0 : index
    %c0_9 = arith.constant 0 : index
    %9 = vector.load %arg5[%c0_8, %c0_9] : memref<1x16xf32, #tpu.memory_space<vmem>>, vector<1x16xf32>
    %10 = vector.broadcast %9 : vector<1x16xf32> to vector<8x16xf32>
    %11 = arith.addf %8, %10 : vector<8x16xf32>
    %c0_10 = arith.constant 0 : index
    %c0_11 = arith.constant 0 : index
    %12 = vector.load %arg6[%c0_10, %c0_11] : memref<8x16xf32, #tpu.memory_space<vmem>>, vector<8x16xf32>
    tpu.vector_store %arg6[%c0_10, %c0_11], %11 {strides = array<i32>} : memref<8x16xf32, #tpu.memory_space<vmem>>, vector<8x16xf32>,
    return
  }
  func.func @transform_0(%arg0: i32) -> (i32, i32) {
    %c0_i32 = arith.constant 0 : i32
    %c0_i32_0 = arith.constant 0 : i32
    return %arg0, %c0_i32 : i32, i32
  }
  func.func @transform_1(%arg0: i32) -> (i32, i32) {
    %c0_i32 = arith.constant 0 : i32
    %c0_i32_0 = arith.constant 0 : i32
    %c0_i32_1 = arith.constant 0 : i32
    return %c0_i32, %c0_i32_0 : i32, i32
  }
  func.func @transform_2(%arg0: i32) -> (i32, i32) {
    %c0_i32 = arith.constant 0 : i32
    %c0_i32_0 = arith.constant 0 : i32
    %c0_i32_1 = arith.constant 0 : i32
    return %c0_i32, %c0_i32_0 : i32, i32
  }
  func.func @transform_3(%arg0: i32) -> (i32, i32) {
    %c0_i32 = arith.constant 0 : i32
    %c0_i32_0 = arith.constant 0 : i32
    %c0_i32_1 = arith.constant 0 : i32
    return %c0_i32, %c0_i32_0 : i32, i32
  }
  func.func @transform_4(%arg0: i32) -> (i32, i32) {
    %c0_i32 = arith.constant 0 : i32
    %c0_i32_0 = arith.constant 0 : i32
    %c0_i32_1 = arith.constant 0 : i32
    return %c0_i32, %c0_i32_0 : i32, i32
  }
  func.func @transform_5(%arg0: i32) -> (i32, i32) {
    %c0_i32 = arith.constant 0 : i32
    %c0_i32_0 = arith.constant 0 : i32
    return %arg0, %c0_i32 : i32, i32
  }
}

</mosaic_0001>

<llo_original>
// kernel: tagger_forward.1
$region0: #{tagger_forward.1}
  #allocation0 [shape = 'u32[]', space=smem, size = 0x4, offset = 0x4, fixed_abs, tag = 'smem constant byte address 0x4 - core index']
  #allocation1 [shape = 'u32[72,128]{1,0:T(1,128)}', space=vmem, size = 0x9000, scoped, tag = 'internal scratch']
  %s0 = inlined_call_operand.vmem [shape: f32[8,64], index: 0, kind: input, shape index: {}]
  %s1 = inlined_call_operand.vmem [shape: f32[64,128], index: 1, kind: input, shape index: {}]
  %s2 = inlined_call_operand.vmem [shape: f32[1,128], index: 2, kind: input, shape index: {}]
  %s3 = inlined_call_operand.vmem [shape: f32[128,16], index: 3, kind: input, shape index: {}]
  %s4 = inlined_call_operand.vmem [shape: f32[1,16], index: 4, kind: input, shape index: {}]
  %s5 = inlined_call_operand.hbm [shape: f32[8,16], index: 5, kind: output, shape index: {}]
  %s6 = sld [smem:[#allocation0]]
  $region30: #{tagger_forward.1} parent=0
    _
  %s8 = ssub.s32 1, %s6
  %s9 = scalar_select 0, %s8, %s6
  $region1: #{tagger_forward.1} parent=0
    #allocation2 [shape = 'u8[4096]{0}', space=vmem, size = 0x1000, scoped, tag = 'output window, operand 0, single buffered']
    #allocation3 [shape = 's32[1]{0}', space=sflag, size = 0x4, scoped, tag = 'scoped memory for tagger_forward.1']
    %10 = vsyncpa [#allocation3], 0
    // Predicated region
    $region2: #{tagger_forward.1} parent=1 // pred_check
      _
    $region3: #{tagger_forward.1} parent=1 // pred_check_branch
      %12 = sbr.rel (0) target = $region5
    $region4: #{tagger_forward.1} parent=1 // pred_region
      _
    $region5: #{tagger_forward.1} parent=1 // pred_fallthru
      _
    // Predicated region
    $region6: #{tagger_forward.1} parent=1 // pred_check
      _
    $region7: #{tagger_forward.1} parent=1 // pred_check_branch
      %14 = sbr.rel (0) target = $region9
    $region8: #{tagger_forward.1} parent=1 // pred_region
      _
    $region9: #{tagger_forward.1} parent=1 // pred_fallthru
      _
    // Predicated region
    $region10: #{tagger_forward.1} parent=1 // pred_check
      _
    $region11: #{tagger_forward.1} parent=1 // pred_check_branch
      %16 = sbr.rel (0) target = $region13
    $region12: #{tagger_forward.1} parent=1 // pred_region
      _
    $region13: #{tagger_forward.1} parent=1 // pred_fallthru
      _
    // Predicated region
    $region14: #{tagger_forward.1} parent=1 // pred_check
      _
    $region15: #{tagger_forward.1} parent=1 // pred_check_branch
      %18 = sbr.rel (0) target = $region17
    $region16: #{tagger_forward.1} parent=1 // pred_region
      _
    $region17: #{tagger_forward.1} parent=1 // pred_fallthru
      _
    // Predicated region
    $region18: #{tagger_forward.1} parent=1 // pred_check
      _
    $region19: #{tagger_forward.1} parent=1 // pred_check_branch
      %20 = sbr.rel (0) target = $region21
    $region20: #{tagger_forward.1} parent=1 // pred_region
      _
    $region21: #{tagger_forward.1} parent=1 // pred_fallthru
      _
    %v21 = vld [vmem:[%s0] sm:$0xff]
    %v22 = vld [vmem:[%s1] sm:$0xff]
    %v23 = vld [vmem:[%s1 + $0x8] sm:$0xff]
    %v24 = vld [vmem:[%s1 + $0x10] sm:$0xff]
    %v25 = vld [vmem:[%s1 + $0x18] sm:$0xff]
    %v26 = vld [vmem:[%s1 + $0x20] sm:$0xff]
    %v27 = vld [vmem:[%s1 + $0x28] sm:$0xff]
    %v28 = vld [vmem:[%s1 + $0x30] sm:$0xff]
    %v29 = vld [vmem:[%s1 + $0x38] sm:$0xff]
    %v30 = vld [vmem:[%s2] sm:$0x1]
    %v32 = vperm.slane %v30, 0
    %vm34 = vcmask 523264
    %v36 = vsel %vm34, %v21, 0
    %38 = vmatpush.msra.mxu0 0.0
    %39 = vmatpush.msra.mxu0 0.0
    %40 = vmatpush.msra.mxu0 0.0
    %41 = vmatpush.msra.mxu0 0.0
    %42 = vmatpush.msra.mxu0 0.0
    %43 = vmatpush.msra.mxu0 0.0
    %44 = vmatpush.msra.mxu0 0.0
    %45 = vmatpush.msra.mxu0 0.0
    %46 = vmatpush.msra.mxu0 %v29
    %47 = vmatpush.msra.mxu0 %v28
    %48 = vmatpush.msra.mxu0 %v27
    %49 = vmatpush.msra.mxu0 %v26
    %50 = vmatpush.msra.mxu0 %v25
    %51 = vmatpush.msra.mxu0 %v24
    %52 = vmatpush.msra.mxu0 %v23
    %53 = vmatpush.msra.mxu0 %v22
    %54 = vmatmul.f32.gmra.mxu0 %v36
    %v55 = vpop.f32.mrf.mxu0
    %v56 = vadd.f32 %v32, %v55
    %57 = vdwg.mxu0
    %v58 = vtanh.pop %v56
    %v59 = vld [vmem:[%s3] sm:$0xff]
    %v60 = vld [vmem:[%s3 + $0x8] sm:$0xff]
    %v61 = vld [vmem:[%s3 + $0x10] sm:$0xff]
    %v62 = vld [vmem:[%s3 + $0x18] sm:$0xff]
    %v63 = vld [vmem:[%s3 + $0x20] sm:$0xff]
    %v64 = vld [vmem:[%s3 + $0x28] sm:$0xff]
    %v65 = vld [vmem:[%s3 + $0x30] sm:$0xff]
    %v66 = vld [vmem:[%s3 + $0x38] sm:$0xff]
    %v67 = vld [vmem:[%s3 + $0x40] sm:$0xff]
    %v68 = vld [vmem:[%s3 + $0x48] sm:$0xff]
    %v69 = vld [vmem:[%s3 + $0x50] sm:$0xff]
    %v70 = vld [vmem:[%s3 + $0x58] sm:$0xff]
    %v71 = vld [vmem:[%s3 + $0x60] sm:$0xff]
    %v72 = vld [vmem:[%s3 + $0x68] sm:$0xff]
    %v73 = vld [vmem:[%s3 + $0x70] sm:$0xff]
    %v74 = vld [vmem:[%s3 + $0x78] sm:$0xff]
    %v75 = vld [vmem:[%s4] sm:$0x1]
    %v77 = vperm.slane %v75, 0
    %79 = vmatpush.msra.mxu0 %v74
    %80 = vmatpush.msra.mxu0 %v73
    %81 = vmatpush.msra.mxu0 %v72
    %82 = vmatpush.msra.mxu0 %v71
    %83 = vmatpush.msra.mxu0 %v70
    %84 = vmatpush.msra.mxu0 %v69
    %85 = vmatpush.msra.mxu0 %v68
    %86 = vmatpush.msra.mxu0 %v67
    %87 = vmatpush.msra.mxu0 %v66
    %88 = vmatpush.msra.mxu0 %v65
    %89 = vmatpush.msra.mxu0 %v64
    %90 = vmatpush.msra.mxu0 %v63
    %91 = vmatpush.msra.mxu0 %v62
    %92 = vmatpush.msra.mxu0 %v61
    %93 = vmatpush.msra.mxu0 %v60
    %94 = vmatpush.msra.mxu0 %v59
    %95 = vmatmul.f32.gmra.mxu0 %v58
    %v96 = vpop.f32.mrf.mxu0
    %v97 = vadd.f32 %v77, %v96
    %98 = vdwg.mxu0
    %vm99 = vcmask 130048
    %100 = vst.msk [vmem:[#allocation2] sm:$0xff] %vm99, %v97
    // Predicated region
    $region22: #{tagger_forward.1} parent=1 // pred_check
      _
    $region23: #{tagger_forward.1} parent=1 // pred_check_branch
      %102 = sbr.rel (0) target = $region25
    $region24: #{tagger_forward.1} parent=1 // pred_region
      %104 = vsyncadd [#allocation3], 0
      %s106 = sshll.u32 [#allocation2], 4
      %s107 = int_to_ptr.vmem [resolvable:$true] %s106
      %s108 = sshll.u32 %s5, 4
      %s109 = int_to_ptr.hbm [resolvable:$true] %s108
      %111 = dma.vmem_to_hbm [thread:$0]  %s107, 128, %s109, [#allocation3]
    $region25: #{tagger_forward.1} parent=1 // pred_fallthru
      _
    // Predicated region
    $region26: #{tagger_forward.1} parent=1 // pred_check
      _
    $region27: #{tagger_forward.1} parent=1 // pred_check_branch
      %113 = sbr.rel (0) target = $region29
    $region28: #{tagger_forward.1} parent=1 // pred_region
      %115 = dma.done [#allocation3], 128
    $region29: #{tagger_forward.1} parent=1 // pred_fallthru
      _
    %116 = vsyncpa [#allocation3], 1

</llo_original>
